<compile_context>
chip_gen: v5e
topology: v5e:2x2
jax: 0.10.0
libtpu: 0.0.40
codegen_flags: <defaults>
</compile_context>

<pallas_src>
import jax
import jax.numpy as jnp
from jax.experimental import pallas as pl
from jax.experimental.pallas import tpu as pltpu  # noqa: F401  (TPU backend import)

FC1 = 32        # width of the first MLP layer (Linear(hidden, 32))
OUT_PAD = 128   # lane padding for the MLP / output so stores are unmasked


def lstm_net_kernel(x_ref, w_ref, b_ref, out_ref):
    Bp = out_ref.shape[0]                 # padded batch (multiple of 8)
    NL = w_ref.shape[1]                   # 128 lanes = 4H
    H = NL // 4                           # hidden size
    D = x_ref.shape[1]                    # pkt_dim
    T = x_ref.shape[0] // Bp              # static sequence length

    # Single lane-dense weight slab: [wih (D,4H); whh (H,4H); w1 pad (H,128); w2 pad (32,128)]
    W = w_ref[...]
    wih = W[0:D, :]                                        # g-columns pre-scaled x2
    whh_bf = W[D:D + H, :].astype(jnp.bfloat16)            # MXU operand only; acc stays f32
    w1 = W[D + H:D + 2 * H, 0:FC1]                         # (H, 32)
    w2 = W[D + 2 * H:D + 2 * H + FC1, :]                   # (32, 128), lanes 2: are zero

    Bias = b_ref[...]                                      # (8, 128) bias slab
    bg = Bias[0:1, :]                                      # (1, 4H), g-columns pre-scaled x2
    b1 = Bias[1:2, 0:FC1]                                  # (1, 32)
    b2 = Bias[2:3, :]                                      # (1, 128)

    # Hoisted input projection for ALL timesteps (off the serial path), bias folded in once.
    xw = jnp.dot(x_ref[...], wih, preferred_element_type=jnp.float32) + bg   # (T*Bp, 4H)

    h = jnp.zeros((Bp, H), jnp.float32)
    c = jnp.zeros((Bp, H), jnp.float32)

    # TODO(synk): hold whh staged in the MXU weight registers across the T dependent matmuls
    # via pltpu.matmul_push_rhs / matmul_acc_lhs / matmul_pop instead of re-issuing the RHS.
    # Statically unrolled recurrence (T=8; switch to lax.fori_loop(..., unroll=True) if T grows).
    for t in range(T):
        gates = xw[t * Bp:(t + 1) * Bp, :] + jnp.dot(
            h.astype(jnp.bfloat16), whh_bf, preferred_element_type=jnp.float32)  # (Bp, 4H)
        s = jax.nn.sigmoid(gates)              # the ONLY full-width gate transcendental
        i = s[:, 0 * H:1 * H]
        f = s[:, 1 * H:2 * H]
        g = 2.0 * s[:, 2 * H:3 * H] - 1.0      # tanh(pre) via pre-scaled columns (VPU only)
        o = s[:, 3 * H:4 * H]
        c = f * c + i * g
        h = o * jnp.tanh(c)

    # MLP head on h[-1]: Linear(H,32) -> ReLU -> Linear(32, 2 padded to 128 lanes).
    z = jnp.maximum(jnp.dot(h, w1, preferred_element_type=jnp.float32) + b1, 0.0)
    logits = jnp.dot(z, w2, preferred_element_type=jnp.float32) + b2
    out_ref[...] = logits.astype(out_ref.dtype)


@jax.jit
def lstm_net_forward(x_btd, w_slab, b_slab):
    """x_btd: (B, T, D) float32 (batch_first, like the PyTorch module)."""
    B, T, D = x_btd.shape
    Bp = ((B + 7) // 8) * 8               # pad batch to the f32 sublane count

    # time-major, zero-padded batch, flattened to (T*Bp, D) for the hoisted projection
    x_tbd = jnp.transpose(x_btd, (1, 0, 2))                       # (T, B, D)
    x_pad = jnp.zeros((T, Bp, D), jnp.float32).at[:, :B, :].set(x_tbd)
    x_flat = x_pad.reshape(T * Bp, D)

    out = pl.pallas_call(
        lstm_net_kernel,
        out_shape=jax.ShapeDtypeStruct((Bp, OUT_PAD), jnp.float32),
    )(x_flat, w_slab, b_slab)

    return out[:B, :2]
    # TODO(synk): for large production batches, add a "parallel" batch grid axis (tiles of
    # 8..128 rows) and compute xw per tile so v7x's second TensorCore gets an independent
    # shard and the whole-batch xw doesn't grow against the 64 MiB VMEM budget.


def init_params(key, pkt_dim, hidden):
    """Deterministic synthetic params mirroring nn.LSTM / nn.Linear shapes (logical, unscaled)."""
    ks = jax.random.split(key, 8)
    s_lstm = 1.0 / jnp.sqrt(hidden)
    u = lambda k, shape, s: jax.random.uniform(k, shape, jnp.float32, -s, s)
    # PyTorch shapes: weight_ih (4H, D), weight_hh (4H, H), biases (4H,)
    w_ih = u(ks[0], (4 * hidden, pkt_dim), s_lstm)
    w_hh = u(ks[1], (4 * hidden, hidden), s_lstm)
    b_ih = u(ks[2], (4 * hidden,), s_lstm)
    b_hh = u(ks[3], (4 * hidden,), s_lstm)
    # fc: Linear(hidden, 32) -> ReLU -> Linear(32, 2)
    s1 = 1.0 / jnp.sqrt(hidden)
    s2 = 1.0 / jnp.sqrt(32)
    w1 = u(ks[4], (FC1, hidden), s1)
    b1 = u(ks[5], (FC1,), s1)
    w2 = u(ks[6], (2, FC1), s2)
    b2 = u(ks[7], (2,), s2)
    return {
        "wih_t": w_ih.T,                              # (D, 4H)
        "whh_t": w_hh.T,                              # (H, 4H)
        "b_gates": (b_ih + b_hh)[None, :],            # (1, 4H)
        "w1_t": w1.T, "b1": b1[None, :],              # (H, 32), (1, 32)
        "w2_t": w2.T, "b2": b2[None, :],              # (32, 2), (1, 2)
    }


def prepare_kernel_params(params):
    """One-time (per model) kernel-param prep: g-gate pre-scaling, lane padding, slab stacking.

    Kept OUT of the per-call forward so no fresh XLA ops run on every invocation.
    """
    wih = params["wih_t"]          # (D, 4H)
    whh = params["whh_t"]          # (H, 4H)
    bg = params["b_gates"]         # (1, 4H)
    D, G = wih.shape
    H = G // 4
    assert G == OUT_PAD, "slab layout assumes 4*hidden == 128 lanes"

    # tanh(x) = 2*sigmoid(2x) - 1: pre-scale the g-gate columns by 2 so the recurrence
    # needs only one full-width sigmoid per step.
    scale = jnp.ones((G,), jnp.float32).at[2 * H:3 * H].set(2.0)
    wih = wih * scale
    whh = whh * scale
    bg = bg * scale

    # lane-pad the MLP weights/biases to 128 so everything stacks into lane-dense slabs
    w1p = jnp.zeros((H, OUT_PAD), jnp.float32).at[:, :FC1].set(params["w1_t"])
    w2p = jnp.zeros((FC1, OUT_PAD), jnp.float32).at[:, :2].set(params["w2_t"])
    b1p = jnp.zeros((1, OUT_PAD), jnp.float32).at[:, :FC1].set(params["b1"])
    b2p = jnp.zeros((1, OUT_PAD), jnp.float32).at[:, :2].set(params["b2"])

    w_slab = jnp.concatenate([wih, whh, w1p, w2p], axis=0)      # (D + 2H + 32, 128)
    b_slab = (jnp.zeros((8, OUT_PAD), jnp.float32)
              .at[0:1].set(bg).at[1:2].set(b1p).at[2:3].set(b2p))
    return {"w_slab": w_slab, "b_slab": b_slab}


def reference_forward(x_btd, params):
    """Pure-JAX reference of the same forward pass (unscaled params, for verification)."""
    B, T, D = x_btd.shape
    H = params["whh_t"].shape[0]
    h = jnp.zeros((B, H), jnp.float32)
    c = jnp.zeros((B, H), jnp.float32)
    for t in range(T):
        gates = (x_btd[:, t, :] @ params["wih_t"] + h @ params["whh_t"]
                 + params["b_gates"])
        i = jax.nn.sigmoid(gates[:, 0 * H:1 * H])
        f = jax.nn.sigmoid(gates[:, 1 * H:2 * H])
        g = jnp.tanh(gates[:, 2 * H:3 * H])
        o = jax.nn.sigmoid(gates[:, 3 * H:4 * H])
        c = f * c + i * g
        h = o * jnp.tanh(c)
    z = jnp.maximum(h @ params["w1_t"] + params["b1"], 0.0)
    return z @ params["w2_t"] + params["b2"]


if __name__ == "__main__":
    B, T, D, H = 2, 8, 16, 32   # batch, seq, pkt_dim, hidden
    key = jax.random.PRNGKey(0)
    kx, kp = jax.random.split(key)
    x = jax.random.normal(kx, (B, T, D), jnp.float32)

    params = init_params(kp, D, H)
    kparams = prepare_kernel_params(params)       # one-time prep (not per-call)

    out = lstm_net_forward(x, kparams["w_slab"], kparams["b_slab"])
    out = jax.block_until_ready(out)

    ref = reference_forward(x, params)
    assert out.shape == (B, 2)
    # bf16 MXU operands in the recurrence (and the tanh-via-sigmoid identity) are not
    # bit-identical to the pure-f32-graph reference; 2e-3 comfortably bounds the drift.
    assert jnp.allclose(out, ref, atol=2e-3, rtol=2e-3), (out, ref)
    print("KERNEL_OK")
</pallas_src>

<mosaic_0001>
module attributes {stable_mosaic.version = 11 : i64} {
  func.func @lstm_net_kernel(%arg0: memref<64x16xf32, #tpu.memory_space<vmem>>, %arg1: memref<112x128xf32, #tpu.memory_space<vmem>>, %arg2: memref<8x128xf32, #tpu.memory_space<vmem>>, %arg3: memref<8x128xf32, #tpu.memory_space<vmem>>) attributes {dimension_semantics = [], scalar_prefetch = 0 : i64, scratch_operands = 0 : i64, tpu.core_type = #tpu.core_type<tc>} {
    %c0 = arith.constant 0 : index
    %c0_0 = arith.constant 0 : index
    %0 = vector.load %arg1[%c0, %c0_0] : memref<112x128xf32, #tpu.memory_space<vmem>>, vector<112x128xf32>
    %1 = vector.extract_strided_slice %0 {offsets = [0, 0], sizes = [16, 128], strides = [1, 1]} : vector<112x128xf32> to vector<16x128xf32>
    %2 = vector.extract_strided_slice %0 {offsets = [16, 0], sizes = [32, 128], strides = [1, 1]} : vector<112x128xf32> to vector<32x128xf32>
    %3 = arith.truncf %2 : vector<32x128xf32> to vector<32x128xbf16>
    %4 = vector.extract_strided_slice %0 {offsets = [48, 0], sizes = [32, 32], strides = [1, 1]} : vector<112x128xf32> to vector<32x32xf32>
    %5 = vector.extract_strided_slice %0 {offsets = [80, 0], sizes = [32, 128], strides = [1, 1]} : vector<112x128xf32> to vector<32x128xf32>
    %c0_1 = arith.constant 0 : index
    %c0_2 = arith.constant 0 : index
    %6 = vector.load %arg2[%c0_1, %c0_2] : memref<8x128xf32, #tpu.memory_space<vmem>>, vector<8x128xf32>
    %7 = vector.extract_strided_slice %6 {offsets = [0, 0], sizes = [1, 128], strides = [1, 1]} : vector<8x128xf32> to vector<1x128xf32>
    %8 = vector.extract_strided_slice %6 {offsets = [1, 0], sizes = [1, 32], strides = [1, 1]} : vector<8x128xf32> to vector<1x32xf32>
    %9 = vector.extract_strided_slice %6 {offsets = [2, 0], sizes = [1, 128], strides = [1, 1]} : vector<8x128xf32> to vector<1x128xf32>
    %c0_3 = arith.constant 0 : index
    %c0_4 = arith.constant 0 : index
    %10 = vector.load %arg0[%c0_3, %c0_4] : memref<64x16xf32, #tpu.memory_space<vmem>>, vector<64x16xf32>
    %cst = arith.constant dense<0.000000e+00> : vector<64x128xf32>
    %11 = tpu.matmul %10, %1, %cst {dimension_numbers = #tpu.dot_dimension_numbers<[1], [0], [0], [1], [0, 0, 1, 1], [], []>} : vector<64x16xf32>, vector<16x128xf32>, vector<64x128xf32> -> vector<64x128xf32>
    %12 = vector.broadcast %7 : vector<1x128xf32> to vector<64x128xf32>
    %13 = arith.addf %11, %12 : vector<64x128xf32>
    %cst_5 = arith.constant 0.000000e+00 : f32
    %14 = vector.broadcast %cst_5 : f32 to vector<8x32xf32>
    %cst_6 = arith.constant 0.000000e+00 : f32
    %15 = vector.broadcast %cst_6 : f32 to vector<8x32xf32>
    %16 = vector.extract_strided_slice %13 {offsets = [0, 0], sizes = [8, 128], strides = [1, 1]} : vector<64x128xf32> to vector<8x128xf32>
    %17 = arith.truncf %14 : vector<8x32xf32> to vector<8x32xbf16>
    %cst_7 = arith.constant dense<0.000000e+00> : vector<8x128xf32>
    %18 = tpu.matmul %17, %3, %cst_7 {dimension_numbers = #tpu.dot_dimension_numbers<[1], [0], [0], [1], [0, 0, 1, 1], [], []>} : vector<8x32xbf16>, vector<32x128xbf16>, vector<8x128xf32> -> vector<8x128xf32>
    %19 = arith.addf %16, %18 : vector<8x128xf32>
    %20 = arith.negf %19 : vector<8x128xf32>
    %21 = math.exp %20 : vector<8x128xf32>
    %cst_8 = arith.constant 1.000000e+00 : f32
    %22 = vector.broadcast %cst_8 : f32 to vector<8x128xf32>
    %23 = arith.addf %22, %21 : vector<8x128xf32>
    %24 = arith.divf %22, %23 : vector<8x128xf32>
    %25 = vector.extract_strided_slice %24 {offsets = [0, 0], sizes = [8, 32], strides = [1, 1]} : vector<8x128xf32> to vector<8x32xf32>
    %26 = vector.extract_strided_slice %24 {offsets = [0, 32], sizes = [8, 32], strides = [1, 1]} : vector<8x128xf32> to vector<8x32xf32>
    %27 = vector.extract_strided_slice %24 {offsets = [0, 64], sizes = [8, 32], strides = [1, 1]} : vector<8x128xf32> to vector<8x32xf32>
    %cst_9 = arith.constant 2.000000e+00 : f32
    %28 = vector.broadcast %cst_9 : f32 to vector<8x32xf32>
    %29 = arith.mulf %28, %27 : vector<8x32xf32>
    %cst_10 = arith.constant 1.000000e+00 : f32
    %30 = vector.broadcast %cst_10 : f32 to vector<8x32xf32>
    %31 = arith.subf %29, %30 : vector<8x32xf32>
    %32 = vector.extract_strided_slice %24 {offsets = [0, 96], sizes = [8, 32], strides = [1, 1]} : vector<8x128xf32> to vector<8x32xf32>
    %33 = arith.mulf %26, %15 : vector<8x32xf32>
    %34 = arith.mulf %25, %31 : vector<8x32xf32>
    %35 = arith.addf %33, %34 : vector<8x32xf32>
    %36 = math.tanh %35 : vector<8x32xf32>
    %37 = arith.mulf %32, %36 : vector<8x32xf32>
    %38 = vector.extract_strided_slice %13 {offsets = [8, 0], sizes = [8, 128], strides = [1, 1]} : vector<64x128xf32> to vector<8x128xf32>
    %39 = arith.truncf %37 : vector<8x32xf32> to vector<8x32xbf16>
    %cst_11 = arith.constant dense<0.000000e+00> : vector<8x128xf32>
    %40 = tpu.matmul %39, %3, %cst_11 {dimension_numbers = #tpu.dot_dimension_numbers<[1], [0], [0], [1], [0, 0, 1, 1], [], []>} : vector<8x32xbf16>, vector<32x128xbf16>, vector<8x128xf32> -> vector<8x128xf32>
    %41 = arith.addf %38, %40 : vector<8x128xf32>
    %42 = arith.negf %41 : vector<8x128xf32>
    %43 = math.exp %42 : vector<8x128xf32>
    %cst_12 = arith.constant 1.000000e+00 : f32
    %44 = vector.broadcast %cst_12 : f32 to vector<8x128xf32>
    %45 = arith.addf %44, %43 : vector<8x128xf32>
    %46 = arith.divf %44, %45 : vector<8x128xf32>
    %47 = vector.extract_strided_slice %46 {offsets = [0, 0], sizes = [8, 32], strides = [1, 1]} : vector<8x128xf32> to vector<8x32xf32>
    %48 = vector.extract_strided_slice %46 {offsets = [0, 32], sizes = [8, 32], strides = [1, 1]} : vector<8x128xf32> to vector<8x32xf32>
    %49 = vector.extract_strided_slice %46 {offsets = [0, 64], sizes = [8, 32], strides = [1, 1]} : vector<8x128xf32> to vector<8x32xf32>
    %cst_13 = arith.constant 2.000000e+00 : f32
    %50 = vector.broadcast %cst_13 : f32 to vector<8x32xf32>
    %51 = arith.mulf %50, %49 : vector<8x32xf32>
    %cst_14 = arith.constant 1.000000e+00 : f32
    %52 = vector.broadcast %cst_14 : f32 to vector<8x32xf32>
    %53 = arith.subf %51, %52 : vector<8x32xf32>
    %54 = vector.extract_strided_slice %46 {offsets = [0, 96], sizes = [8, 32], strides = [1, 1]} : vector<8x128xf32> to vector<8x32xf32>
    %55 = arith.mulf %48, %35 : vector<8x32xf32>
    %56 = arith.mulf %47, %53 : vector<8x32xf32>
    %57 = arith.addf %55, %56 : vector<8x32xf32>
    %58 = math.tanh %57 : vector<8x32xf32>
    %59 = arith.mulf %54, %58 : vector<8x32xf32>
    %60 = vector.extract_strided_slice %13 {offsets = [16, 0], sizes = [8, 128], strides = [1, 1]} : vector<64x128xf32> to vector<8x128xf32>
    %61 = arith.truncf %59 : vector<8x32xf32> to vector<8x32xbf16>
    %cst_15 = arith.constant dense<0.000000e+00> : vector<8x128xf32>
    %62 = tpu.matmul %61, %3, %cst_15 {dimension_numbers = #tpu.dot_dimension_numbers<[1], [0], [0], [1], [0, 0, 1, 1], [], []>} : vector<8x32xbf16>, vector<32x128xbf16>, vector<8x128xf32> -> vector<8x128xf32>
    %63 = arith.addf %60, %62 : vector<8x128xf32>
    %64 = arith.negf %63 : vector<8x128xf32>
    %65 = math.exp %64 : vector<8x128xf32>
    %cst_16 = arith.constant 1.000000e+00 : f32
    %66 = vector.broadcast %cst_16 : f32 to vector<8x128xf32>
    %67 = arith.addf %66, %65 : vector<8x128xf32>
    %68 = arith.divf %66, %67 : vector<8x128xf32>
    %69 = vector.extract_strided_slice %68 {offsets = [0, 0], sizes = [8, 32], strides = [1, 1]} : vector<8x128xf32> to vector<8x32xf32>
    %70 = vector.extract_strided_slice %68 {offsets = [0, 32], sizes = [8, 32], strides = [1, 1]} : vector<8x128xf32> to vector<8x32xf32>
    %71 = vector.extract_strided_slice %68 {offsets = [0, 64], sizes = [8, 32], strides = [1, 1]} : vector<8x128xf32> to vector<8x32xf32>
    %cst_17 = arith.constant 2.000000e+00 : f32
    %72 = vector.broadcast %cst_17 : f32 to vector<8x32xf32>
    %73 = arith.mulf %72, %71 : vector<8x32xf32>
    %cst_18 = arith.constant 1.000000e+00 : f32
    %74 = vector.broadcast %cst_18 : f32 to vector<8x32xf32>
    %75 = arith.subf %73, %74 : vector<8x32xf32>
    %76 = vector.extract_strided_slice %68 {offsets = [0, 96], sizes = [8, 32], strides = [1, 1]} : vector<8x128xf32> to vector<8x32xf32>
    %77 = arith.mulf %70, %57 : vector<8x32xf32>
    %78 = arith.mulf %69, %75 : vector<8x32xf32>
    %79 = arith.addf %77, %78 : vector<8x32xf32>
    %80 = math.tanh %79 : vector<8x32xf32>
    %81 = arith.mulf %76, %80 : vector<8x32xf32>
    %82 = vector.extract_strided_slice %13 {offsets = [24, 0], sizes = [8, 128], strides = [1, 1]} : vector<64x128xf32> to vector<8x128xf32>
    %83 = arith.truncf %81 : vector<8x32xf32> to vector<8x32xbf16>
    %cst_19 = arith.constant dense<0.000000e+00> : vector<8x128xf32>
    %84 = tpu.matmul %83, %3, %cst_19 {dimension_numbers = #tpu.dot_dimension_numbers<[1], [0], [0], [1], [0, 0, 1, 1], [], []>} : vector<8x32xbf16>, vector<32x128xbf16>, vector<8x128xf32> -> vector<8x128xf32>
    %85 = arith.addf %82, %84 : vector<8x128xf32>
    %86 = arith.negf %85 : vector<8x128xf32>
    %87 = math.exp %86 : vector<8x128xf32>
    %cst_20 = arith.constant 1.000000e+00 : f32
    %88 = vector.broadcast %cst_20 : f32 to vector<8x128xf32>
    %89 = arith.addf %88, %87 : vector<8x128xf32>
    %90 = arith.divf %88, %89 : vector<8x128xf32>
    %91 = vector.extract_strided_slice %90 {offsets = [0, 0], sizes = [8, 32], strides = [1, 1]} : vector<8x128xf32> to vector<8x32xf32>
    %92 = vector.extract_strided_slice %90 {offsets = [0, 32], sizes = [8, 32], strides = [1, 1]} : vector<8x128xf32> to vector<8x32xf32>
    %93 = vector.extract_strided_slice %90 {offsets = [0, 64], sizes = [8, 32], strides = [1, 1]} : vector<8x128xf32> to vector<8x32xf32>
    %cst_21 = arith.constant 2.000000e+00 : f32
    %94 = vector.broadcast %cst_21 : f32 to vector<8x32xf32>
    %95 = arith.mulf %94, %93 : vector<8x32xf32>
    %cst_22 = arith.constant 1.000000e+00 : f32
    %96 = vector.broadcast %cst_22 : f32 to vector<8x32xf32>
    %97 = arith.subf %95, %96 : vector<8x32xf32>
    %98 = vector.extract_strided_slice %90 {offsets = [0, 96], sizes = [8, 32], strides = [1, 1]} : vector<8x128xf32> to vector<8x32xf32>
    %99 = arith.mulf %92, %79 : vector<8x32xf32>
    %100 = arith.mulf %91, %97 : vector<8x32xf32>
    %101 = arith.addf %99, %100 : vector<8x32xf32>
    %102 = math.tanh %101 : vector<8x32xf32>
    %103 = arith.mulf %98, %102 : vector<8x32xf32>
    %104 = vector.extract_strided_slice %13 {offsets = [32, 0], sizes = [8, 128], strides = [1, 1]} : vector<64x128xf32> to vector<8x128xf32>
    %105 = arith.truncf %103 : vector<8x32xf32> to vector<8x32xbf16>
    %cst_23 = arith.constant dense<0.000000e+00> : vector<8x128xf32>
    %106 = tpu.matmul %105, %3, %cst_23 {dimension_numbers = #tpu.dot_dimension_numbers<[1], [0], [0], [1], [0, 0, 1, 1], [], []>} : vector<8x32xbf16>, vector<32x128xbf16>, vector<8x128xf32> -> vector<8x128xf32>
    %107 = arith.addf %104, %106 : vector<8x128xf32>
    %108 = arith.negf %107 : vector<8x128xf32>
    %109 = math.exp %108 : vector<8x128xf32>
    %cst_24 = arith.constant 1.000000e+00 : f32
    %110 = vector.broadcast %cst_24 : f32 to vector<8x128xf32>
    %111 = arith.addf %110, %109 : vector<8x128xf32>
    %112 = arith.divf %110, %111 : vector<8x128xf32>
    %113 = vector.extract_strided_slice %112 {offsets = [0, 0], sizes = [8, 32], strides = [1, 1]} : vector<8x128xf32> to vector<8x32xf32>
    %114 = vector.extract_strided_slice %112 {offsets = [0, 32], sizes = [8, 32], strides = [1, 1]} : vector<8x128xf32> to vector<8x32xf32>
    %115 = vector.extract_strided_slice %112 {offsets = [0, 64], sizes = [8, 32], strides = [1, 1]} : vector<8x128xf32> to vector<8x32xf32>
    %cst_25 = arith.constant 2.000000e+00 : f32
    %116 = vector.broadcast %cst_25 : f32 to vector<8x32xf32>
    %117 = arith.mulf %116, %115 : vector<8x32xf32>
    %cst_26 = arith.constant 1.000000e+00 : f32
    %118 = vector.broadcast %cst_26 : f32 to vector<8x32xf32>
    %119 = arith.subf %117, %118 : vector<8x32xf32>
    %120 = vector.extract_strided_slice %112 {offsets = [0, 96], sizes = [8, 32], strides = [1, 1]} : vector<8x128xf32> to vector<8x32xf32>
    %121 = arith.mulf %114, %101 : vector<8x32xf32>
    %122 = arith.mulf %113, %119 : vector<8x32xf32>
    %123 = arith.addf %121, %122 : vector<8x32xf32>
    %124 = math.tanh %123 : vector<8x32xf32>
    %125 = arith.mulf %120, %124 : vector<8x32xf32>
    %126 = vector.extract_strided_slice %13 {offsets = [40, 0], sizes = [8, 128], strides = [1, 1]} : vector<64x128xf32> to vector<8x128xf32>
    %127 = arith.truncf %125 : vector<8x32xf32> to vector<8x32xbf16>
    %cst_27 = arith.constant dense<0.000000e+00> : vector<8x128xf32>
    %128 = tpu.matmul %127, %3, %cst_27 {dimension_numbers = #tpu.dot_dimension_numbers<[1], [0], [0], [1], [0, 0, 1, 1], [], []>} : vector<8x32xbf16>, vector<32x128xbf16>, vector<8x128xf32> -> vector<8x128xf32>
    %129 = arith.addf %126, %128 : vector<8x128xf32>
    %130 = arith.negf %129 : vector<8x128xf32>
    %131 = math.exp %130 : vector<8x128xf32>
    %cst_28 = arith.constant 1.000000e+00 : f32
    %132 = vector.broadcast %cst_28 : f32 to vector<8x128xf32>
    %133 = arith.addf %132, %131 : vector<8x128xf32>
    %134 = arith.divf %132, %133 : vector<8x128xf32>
    %135 = vector.extract_strided_slice %134 {offsets = [0, 0], sizes = [8, 32], strides = [1, 1]} : vector<8x128xf32> to vector<8x32xf32>
    %136 = vector.extract_strided_slice %134 {offsets = [0, 32], sizes = [8, 32], strides = [1, 1]} : vector<8x128xf32> to vector<8x32xf32>
    %137 = vector.extract_strided_slice %134 {offsets = [0, 64], sizes = [8, 32], strides = [1, 1]} : vector<8x128xf32> to vector<8x32xf32>
    %cst_29 = arith.constant 2.000000e+00 : f32
    %138 = vector.broadcast %cst_29 : f32 to vector<8x32xf32>
    %139 = arith.mulf %138, %137 : vector<8x32xf32>
    %cst_30 = arith.constant 1.000000e+00 : f32
    %140 = vector.broadcast %cst_30 : f32 to vector<8x32xf32>
    %141 = arith.subf %139, %140 : vector<8x32xf32>
    %142 = vector.extract_strided_slice %134 {offsets = [0, 96], sizes = [8, 32], strides = [1, 1]} : vector<8x128xf32> to vector<8x32xf32>
    %143 = arith.mulf %136, %123 : vector<8x32xf32>
    %144 = arith.mulf %135, %141 : vector<8x32xf32>
    %145 = arith.addf %143, %144 : vector<8x32xf32>
    %146 = math.tanh %145 : vector<8x32xf32>
    %147 = arith.mulf %142, %146 : vector<8x32xf32>
    %148 = vector.extract_strided_slice %13 {offsets = [48, 0], sizes = [8, 128], strides = [1, 1]} : vector<64x128xf32> to vector<8x128xf32>
    %149 = arith.truncf %147 : vector<8x32xf32> to vector<8x32xbf16>
    %cst_31 = arith.constant dense<0.000000e+00> : vector<8x128xf32>
    %150 = tpu.matmul %149, %3, %cst_31 {dimension_numbers = #tpu.dot_dimension_numbers<[1], [0], [0], [1], [0, 0, 1, 1], [], []>} : vector<8x32xbf16>, vector<32x128xbf16>, vector<8x128xf32> -> vector<8x128xf32>
    %151 = arith.addf %148, %150 : vector<8x128xf32>
    %152 = arith.negf %151 : vector<8x128xf32>
    %153 = math.exp %152 : vector<8x128xf32>
    %cst_32 = arith.constant 1.000000e+00 : f32
    %154 = vector.broadcast %cst_32 : f32 to vector<8x128xf32>
    %155 = arith.addf %154, %153 : vector<8x128xf32>
    %156 = arith.divf %154, %155 : vector<8x128xf32>
    %157 = vector.extract_strided_slice %156 {offsets = [0, 0], sizes = [8, 32], strides = [1, 1]} : vector<8x128xf32> to vector<8x32xf32>
    %158 = vector.extract_strided_slice %156 {offsets = [0, 32], sizes = [8, 32], strides = [1, 1]} : vector<8x128xf32> to vector<8x32xf32>
    %159 = vector.extract_strided_slice %156 {offsets = [0, 64], sizes = [8, 32], strides = [1, 1]} : vector<8x128xf32> to vector<8x32xf32>
    %cst_33 = arith.constant 2.000000e+00 : f32
    %160 = vector.broadcast %cst_33 : f32 to vector<8x32xf32>
    %161 = arith.mulf %160, %159 : vector<8x32xf32>
    %cst_34 = arith.constant 1.000000e+00 : f32
    %162 = vector.broadcast %cst_34 : f32 to vector<8x32xf32>
    %163 = arith.subf %161, %162 : vector<8x32xf32>
    %164 = vector.extract_strided_slice %156 {offsets = [0, 96], sizes = [8, 32], strides = [1, 1]} : vector<8x128xf32> to vector<8x32xf32>
    %165 = arith.mulf %158, %145 : vector<8x32xf32>
    %166 = arith.mulf %157, %163 : vector<8x32xf32>
    %167 = arith.addf %165, %166 : vector<8x32xf32>
    %168 = math.tanh %167 : vector<8x32xf32>
    %169 = arith.mulf %164, %168 : vector<8x32xf32>
    %170 = vector.extract_strided_slice %13 {offsets = [56, 0], sizes = [8, 128], strides = [1, 1]} : vector<64x128xf32> to vector<8x128xf32>
    %171 = arith.truncf %169 : vector<8x32xf32> to vector<8x32xbf16>
    %cst_35 = arith.constant dense<0.000000e+00> : vector<8x128xf32>
    %172 = tpu.matmul %171, %3, %cst_35 {dimension_numbers = #tpu.dot_dimension_numbers<[1], [0], [0], [1], [0, 0, 1, 1], [], []>} : vector<8x32xbf16>, vector<32x128xbf16>, vector<8x128xf32> -> vector<8x128xf32>
    %173 = arith.addf %170, %172 : vector<8x128xf32>
    %174 = arith.negf %173 : vector<8x128xf32>
    %175 = math.exp %174 : vector<8x128xf32>
    %cst_36 = arith.constant 1.000000e+00 : f32
    %176 = vector.broadcast %cst_36 : f32 to vector<8x128xf32>
    %177 = arith.addf %176, %175 : vector<8x128xf32>
    %178 = arith.divf %176, %177 : vector<8x128xf32>
    %179 = vector.extract_strided_slice %178 {offsets = [0, 0], sizes = [8, 32], strides = [1, 1]} : vector<8x128xf32> to vector<8x32xf32>
    %180 = vector.extract_strided_slice %178 {offsets = [0, 32], sizes = [8, 32], strides = [1, 1]} : vector<8x128xf32> to vector<8x32xf32>
    %181 = vector.extract_strided_slice %178 {offsets = [0, 64], sizes = [8, 32], strides = [1, 1]} : vector<8x128xf32> to vector<8x32xf32>
    %cst_37 = arith.constant 2.000000e+00 : f32
    %182 = vector.broadcast %cst_37 : f32 to vector<8x32xf32>
    %183 = arith.mulf %182, %181 : vector<8x32xf32>
    %cst_38 = arith.constant 1.000000e+00 : f32
    %184 = vector.broadcast %cst_38 : f32 to vector<8x32xf32>
    %185 = arith.subf %183, %184 : vector<8x32xf32>
    %186 = vector.extract_strided_slice %178 {offsets = [0, 96], sizes = [8, 32], strides = [1, 1]} : vector<8x128xf32> to vector<8x32xf32>
    %187 = arith.mulf %180, %167 : vector<8x32xf32>
    %188 = arith.mulf %179, %185 : vector<8x32xf32>
    %189 = arith.addf %187, %188 : vector<8x32xf32>
    %190 = math.tanh %189 : vector<8x32xf32>
    %191 = arith.mulf %186, %190 : vector<8x32xf32>
    %cst_39 = arith.constant dense<0.000000e+00> : vector<8x32xf32>
    %192 = tpu.matmul %191, %4, %cst_39 {dimension_numbers = #tpu.dot_dimension_numbers<[1], [0], [0], [1], [0, 0, 1, 1], [], []>} : vector<8x32xf32>, vector<32x32xf32>, vector<8x32xf32> -> vector<8x32xf32>
    %193 = vector.broadcast %8 : vector<1x32xf32> to vector<8x32xf32>
    %194 = arith.addf %192, %193 : vector<8x32xf32>
    %cst_40 = arith.constant 0.000000e+00 : f32
    %195 = vector.broadcast %cst_40 : f32 to vector<8x32xf32>
    %196 = arith.maximumf %194, %195 : vector<8x32xf32>
    %cst_41 = arith.constant dense<0.000000e+00> : vector<8x128xf32>
    %197 = tpu.matmul %196, %5, %cst_41 {dimension_numbers = #tpu.dot_dimension_numbers<[1], [0], [0], [1], [0, 0, 1, 1], [], []>} : vector<8x32xf32>, vector<32x128xf32>, vector<8x128xf32> -> vector<8x128xf32>
    %198 = vector.broadcast %9 : vector<1x128xf32> to vector<8x128xf32>
    %199 = arith.addf %197, %198 : vector<8x128xf32>
    %c0_42 = arith.constant 0 : index
    %c0_43 = arith.constant 0 : index
    %200 = vector.load %arg3[%c0_42, %c0_43] : memref<8x128xf32, #tpu.memory_space<vmem>>, vector<8x128xf32>
    tpu.vector_store %arg3[%c0_42, %c0_43], %199 {strides = array<i32>} : memref<8x128xf32, #tpu.memory_space<vmem>>, vector<8x128xf32>,
    return
  }
}

</mosaic_0001>

<llo_original>
// kernel: lstm_net_forward.1
$region0: #{lstm_net_forward.1}
  #allocation0 [shape = 'u32[]', space=smem, size = 0x4, offset = 0x4, fixed_abs, tag = 'smem constant byte address 0x4 - core index']
  #allocation1 [shape = 'u32[72,128]{1,0:T(1,128)}', space=vmem, size = 0x9000, scoped, tag = 'internal scratch']
  %s0 = inlined_call_operand.vmem [shape: f32[64,16], index: 0, kind: input, shape index: {}]
  %s1 = inlined_call_operand.vmem [shape: f32[112,128], index: 1, kind: input, shape index: {}]
  %s2 = inlined_call_operand.hbm [shape: f32[8,128], index: 2, kind: input, shape index: {}]
  %s3 = inlined_call_operand.vmem [shape: f32[8,128], index: 3, kind: output, shape index: {}]
  %s4 = sld [smem:[#allocation0]]
  $region26: #{lstm_net_forward.1} parent=0
    _
  %s6 = ssub.s32 1, %s4
  %s7 = scalar_select 0, %s6, %s4
  $region1: #{lstm_net_forward.1} parent=0
    #allocation2 [shape = 'u8[4096]{0}', space=vmem, size = 0x1000, scoped, tag = 'input window, operand 2, single buffered']
    #allocation3 [shape = 's32[1]{0}', space=sflag, size = 0x4, scoped, tag = 'scoped memory for lstm_net_forward.1']
    %8 = vsyncpa [#allocation3], 0
    // Predicated region
    $region2: #{lstm_net_forward.1} parent=1 // pred_check
      _
    $region3: #{lstm_net_forward.1} parent=1 // pred_check_branch
      %10 = sbr.rel (0) target = $region5
    $region4: #{lstm_net_forward.1} parent=1 // pred_region
      _
    $region5: #{lstm_net_forward.1} parent=1 // pred_fallthru
      _
    // Predicated region
    $region6: #{lstm_net_forward.1} parent=1 // pred_check
      _
    $region7: #{lstm_net_forward.1} parent=1 // pred_check_branch
      %12 = sbr.rel (0) target = $region9
    $region8: #{lstm_net_forward.1} parent=1 // pred_region
      _
    $region9: #{lstm_net_forward.1} parent=1 // pred_fallthru
      _
    // Predicated region
    $region10: #{lstm_net_forward.1} parent=1 // pred_check
      _
    $region11: #{lstm_net_forward.1} parent=1 // pred_check_branch
      %14 = sbr.rel (0) target = $region13
    $region12: #{lstm_net_forward.1} parent=1 // pred_region
      %16 = vsyncadd [#allocation3], 0
      %s18 = sshll.u32 %s2, 4
      %s19 = int_to_ptr.hbm [resolvable:$true] %s18
      %s20 = sshll.u32 [#allocation2], 4
      %s21 = int_to_ptr.vmem [resolvable:$true] %s20
      %23 = dma.hbm_to_vmem [thread:$0]  %s19, 128, %s21, [#allocation3]
    $region13: #{lstm_net_forward.1} parent=1 // pred_fallthru
      _
    // Predicated region
    $region14: #{lstm_net_forward.1} parent=1 // pred_check
      _
    $region15: #{lstm_net_forward.1} parent=1 // pred_check_branch
      %25 = sbr.rel (0) target = $region17
    $region16: #{lstm_net_forward.1} parent=1 // pred_region
      %27 = dma.done [#allocation3], 128
    $region17: #{lstm_net_forward.1} parent=1 // pred_fallthru
      _
    %v29 = vld [vmem:[%s1] sm:$0xff]
    %v30 = vld [vmem:[%s1 + $0x8] sm:$0xff]
    %v31 = vld [vmem:[%s1 + $0x10] sm:$0xff]
    %v32 = vld [vmem:[%s1 + $0x18] sm:$0xff]
    %v33 = vld [vmem:[%s1 + $0x20] sm:$0xff]
    %v34 = vld [vmem:[%s1 + $0x28] sm:$0xff]
    %v35 = vld [vmem:[%s1 + $0x30] sm:$0xff]
    %v36 = vld [vmem:[%s1 + $0x38] sm:$0xff]
    %v37 = vld [vmem:[%s1 + $0x40] sm:$0xff]
    %v38 = vld [vmem:[%s1 + $0x48] sm:$0xff]
    %v39 = vld [vmem:[%s1 + $0x50] sm:$0xff]
    %v40 = vld [vmem:[%s1 + $0x58] sm:$0xff]
    %v41 = vld [vmem:[%s1 + $0x60] sm:$0xff]
    %v42 = vld [vmem:[%s1 + $0x68] sm:$0xff]
    %v43 = vpack.c.bf16 %v32, %v31
    %v44 = vpack.c.bf16 %v34, %v33
    %v45 = vld [vmem:[#allocation2] sm:$0xff]
    %v46 = vld [vmem:[%s0] sm:$0xff]
    %v47 = vld [vmem:[%s0 + $0x8] sm:$0xff]
    %v48 = vld [vmem:[%s0 + $0x10] sm:$0xff]
    %v49 = vld [vmem:[%s0 + $0x18] sm:$0xff]
    %v50 = vld [vmem:[%s0 + $0x20] sm:$0xff]
    %v51 = vld [vmem:[%s0 + $0x28] sm:$0xff]
    %v52 = vld [vmem:[%s0 + $0x30] sm:$0xff]
    %v53 = vld [vmem:[%s0 + $0x38] sm:$0xff]
    %v54 = vperm.slane %v45, 0
    %vm55 = vcmask 130048
    %v57 = vsel %vm55, %v46, 0
    %v60 = vsel %vm55, %v47, 0
    %v63 = vsel %vm55, %v48, 0
    %v66 = vsel %vm55, %v49, 0
    %v69 = vsel %vm55, %v50, 0
    %v72 = vsel %vm55, %v51, 0
    %v75 = vsel %vm55, %v52, 0
    %v78 = vsel %vm55, %v53, 0
    %80 = vmatpush.msra.mxu0 0.0
    %81 = vmatpush.msra.mxu0 0.0
    %82 = vmatpush.msra.mxu0 0.0
    %83 = vmatpush.msra.mxu0 0.0
    %84 = vmatpush.msra.mxu0 0.0
    %85 = vmatpush.msra.mxu0 0.0
    %86 = vmatpush.msra.mxu0 0.0
    %87 = vmatpush.msra.mxu0 0.0
    %88 = vmatpush.msra.mxu0 0.0
    %89 = vmatpush.msra.mxu0 0.0
    %90 = vmatpush.msra.mxu0 0.0
    %91 = vmatpush.msra.mxu0 0.0
    %92 = vmatpush.msra.mxu0 0.0
    %93 = vmatpush.msra.mxu0 0.0
    %94 = vmatpush.msra.mxu0 %v30
    %95 = vmatpush.msra.mxu0 %v29
    %96 = vmatmul.f32.gmra.mxu0 %v57
    %v97 = vpop.f32.mrf.mxu0
    %v98 = vadd.f32 %v54, %v97
    %99 = vmatmul.f32.gmra.mxu0 %v60
    %v100 = vpop.f32.mrf.mxu0
    %v101 = vadd.f32 %v54, %v100
    %102 = vmatmul.f32.gmra.mxu0 %v63
    %v103 = vpop.f32.mrf.mxu0
    %v104 = vadd.f32 %v54, %v103
    %105 = vmatmul.f32.gmra.mxu0 %v66
    %v106 = vpop.f32.mrf.mxu0
    %v107 = vadd.f32 %v54, %v106
    %108 = vmatmul.f32.gmra.mxu0 %v69
    %v109 = vpop.f32.mrf.mxu0
    %v110 = vadd.f32 %v54, %v109
    %111 = vmatmul.f32.gmra.mxu0 %v72
    %v112 = vpop.f32.mrf.mxu0
    %v113 = vadd.f32 %v54, %v112
    %114 = vmatmul.f32.gmra.mxu0 %v75
    %v115 = vpop.f32.mrf.mxu0
    %v116 = vadd.f32 %v54, %v115
    %117 = vmatmul.f32.gmra.mxu0 %v78
    %v118 = vpop.f32.mrf.mxu0
    %v119 = vadd.f32 %v54, %v118
    %120 = vdwg.mxu0
    %vm121 = vcmask 261120
    %v123 = vsel %vm121, 0, 0
    %125 = vmatpush.bf16.msra.mxu0 0
    %126 = vmatpush.bf16.msra.mxu0 0
    %127 = vmatpush.bf16.msra.mxu0 0
    %128 = vmatpush.bf16.msra.mxu0 0
    %129 = vmatpush.bf16.msra.mxu0 0
    %130 = vmatpush.bf16.msra.mxu0 0
    %131 = vmatpush.bf16.msra.mxu0 %v44
    %132 = vmatpush.bf16.msra.mxu0 %v43
    %133 = vmatmul.bf16.gmra.mxu0 %v123
    %v134 = vpop.f32.mrf.mxu0
    %v135 = vadd.f32 0.0, %v134
    %v136 = vpop.f32.mrf.mxu0
    %137 = vdwg.mxu0
    %v138 = vadd.f32 %v98, %v135
    %v139 = vxor.u32 %v138, 2147483648
    %v140 = vmul.f32 %v139, 1.442695
    %v141 = vpow.pop %v140
    %v142 = vadd.f32 %v141, 1.0
    %v143 = vrcp.pop %v142
    %v144 = vmul.f32 %v142, %v143
    %v145 = vsub.f32 1.0, %v144
    %v146 = vmul.f32 %v143, %v145
    %v147 = vadd.f32 %v143, %v146
    %vm148 = vweird.f32 %v142
    %vm149 = vweird.f32 %v143
    %vm150 = vmor %vm148, %vm149
    %v151 = vsel %vm150, %v143, %v147
    %v152 = vand.u32 2147483647, %v142
    %vm153 = vcmp.eq.f32.partialorder %v152, 8.507059e+37
    %v154 = vand.u32 %v142, 2147483648
    %v155 = vor.u32 1.1754944e-38, %v154
    %v156 = vsel %vm153, %v155, %v151
    %v157 = vmul.f32 1.0, %v156
    %v158 = vmul.f32 %v157, 2.0
    %v159 = vsub.f32 %v158, 1.0
    %v160 = vmul.f32 %v157, 0.0
    %162 = vrot.lane.b32.xlu0 %v159, 64
    %v163 = vpop.permute.xlu0 %162
    %v165 = vmul.f32 %v157, %v163
    %167 = vrot.lane.b32.xlu0 %v165, 32
    %v168 = vpop.permute.xlu0 %167
    %v170 = vadd.f32 %v160, %v168
    %v171 = vtanh.pop %v170
    %173 = vrot.lane.b32.xlu0 %v171, 64
    %v174 = vpop.permute.xlu0 %173
    %v176 = vmul.f32 %v157, %v174
    %v177 = vpack.c.bf16 %v176, %v176
    %179 = vrot.lane.b32.xlu0 %v177, 32
    %v180 = vpop.permute.xlu0 %179
    %v182 = vsel %vm121, %v180, 0
    %184 = vmatpush.bf16.msra.mxu0 0
    %185 = vmatpush.bf16.msra.mxu0 0
    %186 = vmatpush.bf16.msra.mxu0 0
    %187 = vmatpush.bf16.msra.mxu0 0
    %188 = vmatpush.bf16.msra.mxu0 0
    %189 = vmatpush.bf16.msra.mxu0 0
    %190 = vmatpush.bf16.msra.mxu0 %v44
    %191 = vmatpush.bf16.msra.mxu0 %v43
    %192 = vmatmul.bf16.gmra.mxu0 %v182
    %v193 = vpop.f32.mrf.mxu0
    %v194 = vadd.f32 0.0, %v193
    %v195 = vpop.f32.mrf.mxu0
    %196 = vdwg.mxu0
    %v197 = vadd.f32 %v101, %v194
    %v198 = vxor.u32 %v197, 2147483648
    %v199 = vmul.f32 %v198, 1.442695
    %v200 = vpow.pop %v199
    %v201 = vadd.f32 %v200, 1.0
    %v202 = vrcp.pop %v201
    %v203 = vmul.f32 %v201, %v202
    %v204 = vsub.f32 1.0, %v203
    %v205 = vmul.f32 %v202, %v204
    %v206 = vadd.f32 %v202, %v205
    %vm207 = vweird.f32 %v201
    %vm208 = vweird.f32 %v202
    %vm209 = vmor %vm207, %vm208
    %v210 = vsel %vm209, %v202, %v206
    %v211 = vand.u32 2147483647, %v201
    %vm212 = vcmp.eq.f32.partialorder %v211, 8.507059e+37
    %v213 = vand.u32 %v201, 2147483648
    %v214 = vor.u32 1.1754944e-38, %v213
    %v215 = vsel %vm212, %v214, %v210
    %v216 = vmul.f32 1.0, %v215
    %v217 = vmul.f32 %v216, 2.0
    %v218 = vsub.f32 %v217, 1.0
    %v219 = vmul.f32 %v216, %v170
    %221 = vrot.lane.b32.xlu0 %v218, 64
    %v222 = vpop.permute.xlu0 %221
    %v224 = vmul.f32 %v216, %v222
    %226 = vrot.lane.b32.xlu0 %v224, 32
    %v227 = vpop.permute.xlu0 %226
    %v229 = vadd.f32 %v219, %v227
    %v230 = vtanh.pop %v229
    %232 = vrot.lane.b32.xlu0 %v230, 64
    %v233 = vpop.permute.xlu0 %232
    %v235 = vmul.f32 %v216, %v233
    %v236 = vpack.c.bf16 %v235, %v235
    %238 = vrot.lane.b32.xlu0 %v236, 32
    %v239 = vpop.permute.xlu0 %238
    %v241 = vsel %vm121, %v239, 0
    %243 = vmatpush.bf16.msra.mxu0 0
    %244 = vmatpush.bf16.msra.mxu0 0
    %245 = vmatpush.bf16.msra.mxu0 0
    %246 = vmatpush.bf16.msra.mxu0 0
    %247 = vmatpush.bf16.msra.mxu0 0
    %248 = vmatpush.bf16.msra.mxu0 0
    %249 = vmatpush.bf16.msra.mxu0 %v44
    %250 = vmatpush.bf16.msra.mxu0 %v43
    %251 = vmatmul.bf16.gmra.mxu0 %v241
    %v252 = vpop.f32.mrf.mxu0
    %v253 = vadd.f32 0.0, %v252
    %v254 = vpop.f32.mrf.mxu0
    %255 = vdwg.mxu0
    %v256 = vadd.f32 %v104, %v253
    %v257 = vxor.u32 %v256, 2147483648
    %v258 = vmul.f32 %v257, 1.442695
    %v259 = vpow.pop %v258
    %v260 = vadd.f32 %v259, 1.0
    %v261 = vrcp.pop %v260
    %v262 = vmul.f32 %v260, %v261
    %v263 = vsub.f32 1.0, %v262
    %v264 = vmul.f32 %v261, %v263
    %v265 = vadd.f32 %v261, %v264
    %vm266 = vweird.f32 %v260
    %vm267 = vweird.f32 %v261
    %vm268 = vmor %vm266, %vm267
    %v269 = vsel %vm268, %v261, %v265
    %v270 = vand.u32 2147483647, %v260
    %vm271 = vcmp.eq.f32.partialorder %v270, 8.507059e+37
    %v272 = vand.u32 %v260, 2147483648
    %v273 = vor.u32 1.1754944e-38, %v272
    %v274 = vsel %vm271, %v273, %v269
    %v275 = vmul.f32 1.0, %v274
    %v276 = vmul.f32 %v275, 2.0
    %v277 = vsub.f32 %v276, 1.0
    %v278 = vmul.f32 %v275, %v229
    %280 = vrot.lane.b32.xlu0 %v277, 64
    %v281 = vpop.permute.xlu0 %280
    %v283 = vmul.f32 %v275, %v281
    %285 = vrot.lane.b32.xlu0 %v283, 32
    %v286 = vpop.permute.xlu0 %285
    %v288 = vadd.f32 %v278, %v286
    %v289 = vtanh.pop %v288
    %291 = vrot.lane.b32.xlu0 %v289, 64
    %v292 = vpop.permute.xlu0 %291
    %v294 = vmul.f32 %v275, %v292
    %v295 = vpack.c.bf16 %v294, %v294
    %297 = vrot.lane.b32.xlu0 %v295, 32
    %v298 = vpop.permute.xlu0 %297
    %v300 = vsel %vm121, %v298, 0
    %302 = vmatpush.bf16.msra.mxu0 0
    %303 = vmatpush.bf16.msra.mxu0 0
    %304 = vmatpush.bf16.msra.mxu0 0
    %305 = vmatpush.bf16.msra.mxu0 0
    %306 = vmatpush.bf16.msra.mxu0 0
    %307 = vmatpush.bf16.msra.mxu0 0
    %308 = vmatpush.bf16.msra.mxu0 %v44
    %309 = vmatpush.bf16.msra.mxu0 %v43
    %310 = vmatmul.bf16.gmra.mxu0 %v300
    %v311 = vpop.f32.mrf.mxu0
    %v312 = vadd.f32 0.0, %v311
    %v313 = vpop.f32.mrf.mxu0
    %314 = vdwg.mxu0
    %v315 = vadd.f32 %v107, %v312
    %v316 = vxor.u32 %v315, 2147483648
    %v317 = vmul.f32 %v316, 1.442695
    %v318 = vpow.pop %v317
    %v319 = vadd.f32 %v318, 1.0
    %v320 = vrcp.pop %v319
    %v321 = vmul.f32 %v319, %v320
    %v322 = vsub.f32 1.0, %v321
    %v323 = vmul.f32 %v320, %v322
    %v324 = vadd.f32 %v320, %v323
    %vm325 = vweird.f32 %v319
    %vm326 = vweird.f32 %v320
    %vm327 = vmor %vm325, %vm326
    %v328 = vsel %vm327, %v320, %v324
    %v329 = vand.u32 2147483647, %v319
    %vm330 = vcmp.eq.f32.partialorder %v329, 8.507059e+37
    %v331 = vand.u32 %v319, 2147483648
    %v332 = vor.u32 1.1754944e-38, %v331
    %v333 = vsel %vm330, %v332, %v328
    %v334 = vmul.f32 1.0, %v333
    %v335 = vmul.f32 %v334, 2.0
    %v336 = vsub.f32 %v335, 1.0
    %v337 = vmul.f32 %v334, %v288
    %339 = vrot.lane.b32.xlu0 %v336, 64
    %v340 = vpop.permute.xlu0 %339
    %v342 = vmul.f32 %v334, %v340
    %344 = vrot.lane.b32.xlu0 %v342, 32
    %v345 = vpop.permute.xlu0 %344
    %v347 = vadd.f32 %v337, %v345
    %v348 = vtanh.pop %v347
    %350 = vrot.lane.b32.xlu0 %v348, 64
    %v351 = vpop.permute.xlu0 %350
    %v353 = vmul.f32 %v334, %v351
    %v354 = vpack.c.bf16 %v353, %v353
    %356 = vrot.lane.b32.xlu0 %v354, 32
    %v357 = vpop.permute.xlu0 %356
    %v359 = vsel %vm121, %v357, 0
    %361 = vmatpush.bf16.msra.mxu0 0
    %362 = vmatpush.bf16.msra.mxu0 0
    %363 = vmatpush.bf16.msra.mxu0 0
    %364 = vmatpush.bf16.msra.mxu0 0
    %365 = vmatpush.bf16.msra.mxu0 0
    %366 = vmatpush.bf16.msra.mxu0 0
    %367 = vmatpush.bf16.msra.mxu0 %v44
    %368 = vmatpush.bf16.msra.mxu0 %v43
    %369 = vmatmul.bf16.gmra.mxu0 %v359
    %v370 = vpop.f32.mrf.mxu0
    %v371 = vadd.f32 0.0, %v370
    %v372 = vpop.f32.mrf.mxu0
    %373 = vdwg.mxu0
    %v374 = vadd.f32 %v110, %v371
    %v375 = vxor.u32 %v374, 2147483648
    %v376 = vmul.f32 %v375, 1.442695
    %v377 = vpow.pop %v376
    %v378 = vadd.f32 %v377, 1.0
    %v379 = vrcp.pop %v378
    %v380 = vmul.f32 %v378, %v379
    %v381 = vsub.f32 1.0, %v380
    %v382 = vmul.f32 %v379, %v381
    %v383 = vadd.f32 %v379, %v382
    %vm384 = vweird.f32 %v378
    %vm385 = vweird.f32 %v379
    %vm386 = vmor %vm384, %vm385
    %v387 = vsel %vm386, %v379, %v383
    %v388 = vand.u32 2147483647, %v378
    %vm389 = vcmp.eq.f32.partialorder %v388, 8.507059e+37
    %v390 = vand.u32 %v378, 2147483648
    %v391 = vor.u32 1.1754944e-38, %v390
    %v392 = vsel %vm389, %v391, %v387
    %v393 = vmul.f32 1.0, %v392
    %v394 = vmul.f32 %v393, 2.0
    %v395 = vsub.f32 %v394, 1.0
    %v396 = vmul.f32 %v393, %v347
    %398 = vrot.lane.b32.xlu0 %v395, 64
    %v399 = vpop.permute.xlu0 %398
    %v401 = vmul.f32 %v393, %v399
    %403 = vrot.lane.b32.xlu0 %v401, 32
    %v404 = vpop.permute.xlu0 %403
    %v406 = vadd.f32 %v396, %v404
    %v407 = vtanh.pop %v406
    %409 = vrot.lane.b32.xlu0 %v407, 64
    %v410 = vpop.permute.xlu0 %409
    %v412 = vmul.f32 %v393, %v410
    %v413 = vpack.c.bf16 %v412, %v412
    %415 = vrot.lane.b32.xlu0 %v413, 32
    %v416 = vpop.permute.xlu0 %415
    %v418 = vsel %vm121, %v416, 0
    %420 = vmatpush.bf16.msra.mxu0 0
    %421 = vmatpush.bf16.msra.mxu0 0
    %422 = vmatpush.bf16.msra.mxu0 0
    %423 = vmatpush.bf16.msra.mxu0 0
    %424 = vmatpush.bf16.msra.mxu0 0
    %425 = vmatpush.bf16.msra.mxu0 0
    %426 = vmatpush.bf16.msra.mxu0 %v44
    %427 = vmatpush.bf16.msra.mxu0 %v43
    %428 = vmatmul.bf16.gmra.mxu0 %v418
    %v429 = vpop.f32.mrf.mxu0
    %v430 = vadd.f32 0.0, %v429
    %v431 = vpop.f32.mrf.mxu0
    %432 = vdwg.mxu0
    %v433 = vadd.f32 %v113, %v430
    %v434 = vxor.u32 %v433, 2147483648
    %v435 = vmul.f32 %v434, 1.442695
    %v436 = vpow.pop %v435
    %v437 = vadd.f32 %v436, 1.0
    %v438 = vrcp.pop %v437
    %v439 = vmul.f32 %v437, %v438
    %v440 = vsub.f32 1.0, %v439
    %v441 = vmul.f32 %v438, %v440
    %v442 = vadd.f32 %v438, %v441
    %vm443 = vweird.f32 %v437
    %vm444 = vweird.f32 %v438
    %vm445 = vmor %vm443, %vm444
    %v446 = vsel %vm445, %v438, %v442
    %v447 = vand.u32 2147483647, %v437
    %vm448 = vcmp.eq.f32.partialorder %v447, 8.507059e+37
    %v449 = vand.u32 %v437, 2147483648
    %v450 = vor.u32 1.1754944e-38, %v449
    %v451 = vsel %vm448, %v450, %v446
    %v452 = vmul.f32 1.0, %v451
    %v453 = vmul.f32 %v452, 2.0
    %v454 = vsub.f32 %v453, 1.0
    %v455 = vmul.f32 %v452, %v406
    %457 = vrot.lane.b32.xlu0 %v454, 64
    %v458 = vpop.permute.xlu0 %457
    %v460 = vmul.f32 %v452, %v458
    %462 = vrot.lane.b32.xlu0 %v460, 32
    %v463 = vpop.permute.xlu0 %462
    %v465 = vadd.f32 %v455, %v463
    %v466 = vtanh.pop %v465
    %468 = vrot.lane.b32.xlu0 %v466, 64
    %v469 = vpop.permute.xlu0 %468
    %v471 = vmul.f32 %v452, %v469
    %v472 = vpack.c.bf16 %v471, %v471
    %474 = vrot.lane.b32.xlu0 %v472, 32
    %v475 = vpop.permute.xlu0 %474
    %v477 = vsel %vm121, %v475, 0
    %479 = vmatpush.bf16.msra.mxu0 0
    %480 = vmatpush.bf16.msra.mxu0 0
    %481 = vmatpush.bf16.msra.mxu0 0
    %482 = vmatpush.bf16.msra.mxu0 0
    %483 = vmatpush.bf16.msra.mxu0 0
    %484 = vmatpush.bf16.msra.mxu0 0
    %485 = vmatpush.bf16.msra.mxu0 %v44
    %486 = vmatpush.bf16.msra.mxu0 %v43
    %487 = vmatmul.bf16.gmra.mxu0 %v477
    %v488 = vpop.f32.mrf.mxu0
    %v489 = vadd.f32 0.0, %v488
    %v490 = vpop.f32.mrf.mxu0
    %491 = vdwg.mxu0
    %v492 = vadd.f32 %v116, %v489
    %v493 = vxor.u32 %v492, 2147483648
    %v494 = vmul.f32 %v493, 1.442695
    %v495 = vpow.pop %v494
    %v496 = vadd.f32 %v495, 1.0
    %v497 = vrcp.pop %v496
    %v498 = vmul.f32 %v496, %v497
    %v499 = vsub.f32 1.0, %v498
    %v500 = vmul.f32 %v497, %v499
    %v501 = vadd.f32 %v497, %v500
    %vm502 = vweird.f32 %v496
    %vm503 = vweird.f32 %v497
    %vm504 = vmor %vm502, %vm503
    %v505 = vsel %vm504, %v497, %v501
    %v506 = vand.u32 2147483647, %v496
    %vm507 = vcmp.eq.f32.partialorder %v506, 8.507059e+37
    %v508 = vand.u32 %v496, 2147483648
    %v509 = vor.u32 1.1754944e-38, %v508
    %v510 = vsel %vm507, %v509, %v505
    %v511 = vmul.f32 1.0, %v510
    %v512 = vmul.f32 %v511, 2.0
    %v513 = vsub.f32 %v512, 1.0
    %v514 = vmul.f32 %v511, %v465
    %516 = vrot.lane.b32.xlu0 %v513, 64
    %v517 = vpop.permute.xlu0 %516
    %v519 = vmul.f32 %v511, %v517
    %521 = vrot.lane.b32.xlu0 %v519, 32
    %v522 = vpop.permute.xlu0 %521
    %v524 = vadd.f32 %v514, %v522
    %v525 = vtanh.pop %v524
    %527 = vrot.lane.b32.xlu0 %v525, 64
    %v528 = vpop.permute.xlu0 %527
    %v530 = vmul.f32 %v511, %v528
    %v531 = vpack.c.bf16 %v530, %v530
    %533 = vrot.lane.b32.xlu0 %v531, 32
    %v534 = vpop.permute.xlu0 %533
    %v536 = vsel %vm121, %v534, 0
    %538 = vmatpush.bf16.msra.mxu0 0
    %539 = vmatpush.bf16.msra.mxu0 0
    %540 = vmatpush.bf16.msra.mxu0 0
    %541 = vmatpush.bf16.msra.mxu0 0
    %542 = vmatpush.bf16.msra.mxu0 0
    %543 = vmatpush.bf16.msra.mxu0 0
    %544 = vmatpush.bf16.msra.mxu0 %v44
    %545 = vmatpush.bf16.msra.mxu0 %v43
    %546 = vmatmul.bf16.gmra.mxu0 %v536
    %v547 = vpop.f32.mrf.mxu0
    %v548 = vadd.f32 0.0, %v547
    %v549 = vpop.f32.mrf.mxu0
    %550 = vdwg.mxu0
    %v551 = vadd.f32 %v119, %v548
    %v552 = vxor.u32 %v551, 2147483648
    %v553 = vmul.f32 %v552, 1.442695
    %v554 = vpow.pop %v553
    %v555 = vadd.f32 %v554, 1.0
    %v556 = vrcp.pop %v555
    %v557 = vmul.f32 %v555, %v556
    %v558 = vsub.f32 1.0, %v557
    %v559 = vmul.f32 %v556, %v558
    %v560 = vadd.f32 %v556, %v559
    %vm561 = vweird.f32 %v555
    %vm562 = vweird.f32 %v556
    %vm563 = vmor %vm561, %vm562
    %v564 = vsel %vm563, %v556, %v560
    %v565 = vand.u32 2147483647, %v555
    %vm566 = vcmp.eq.f32.partialorder %v565, 8.507059e+37
    %v567 = vand.u32 %v555, 2147483648
    %v568 = vor.u32 1.1754944e-38, %v567
    %v569 = vsel %vm566, %v568, %v564
    %v570 = vmul.f32 1.0, %v569
    %v571 = vmul.f32 %v570, 2.0
    %v572 = vsub.f32 %v571, 1.0
    %v573 = vmul.f32 %v570, %v524
    %575 = vrot.lane.b32.xlu0 %v572, 64
    %v576 = vpop.permute.xlu0 %575
    %v578 = vmul.f32 %v570, %v576
    %580 = vrot.lane.b32.xlu0 %v578, 32
    %v581 = vpop.permute.xlu0 %580
    %v583 = vadd.f32 %v573, %v581
    %v584 = vtanh.pop %v583
    %586 = vrot.lane.b32.xlu0 %v584, 64
    %v587 = vpop.permute.xlu0 %586
    %v589 = vmul.f32 %v570, %v587
    %v590 = vperm.slane %v45, 1
    %592 = vrot.lane.b32.xlu0 %v589, 32
    %v593 = vpop.permute.xlu0 %592
    %v594 = vsel %vm121, %v593, 0
    %596 = vmatpush.msra.mxu0 0.0
    %597 = vmatpush.msra.mxu0 0.0
    %598 = vmatpush.msra.mxu0 0.0
    %599 = vmatpush.msra.mxu0 0.0
    %600 = vmatpush.msra.mxu0 0.0
    %601 = vmatpush.msra.mxu0 0.0
    %602 = vmatpush.msra.mxu0 0.0
    %603 = vmatpush.msra.mxu0 0.0
    %604 = vmatpush.msra.mxu0 0.0
    %605 = vmatpush.msra.mxu0 0.0
    %606 = vmatpush.msra.mxu0 0.0
    %607 = vmatpush.msra.mxu0 0.0
    %608 = vmatpush.msra.mxu0 %v38
    %609 = vmatpush.msra.mxu0 %v37
    %610 = vmatpush.msra.mxu0 %v36
    %611 = vmatpush.msra.mxu0 %v35
    %612 = vmatmul.f32.gmra.mxu0 %v594
    %v613 = vpop.f32.mrf.mxu0
    %v614 = vadd.f32 %v590, %v613
    %615 = vdwg.mxu0
    %v616 = vmax.f32 %v614, 0.0
    %v617 = vperm.slane %v45, 2
    %v619 = vsel %vm121, %v616, 0
    %621 = vmatpush.msra.mxu0 0.0
    %622 = vmatpush.msra.mxu0 0.0
    %623 = vmatpush.msra.mxu0 0.0
    %624 = vmatpush.msra.mxu0 0.0
    %625 = vmatpush.msra.mxu0 0.0
    %626 = vmatpush.msra.mxu0 0.0
    %627 = vmatpush.msra.mxu0 0.0
    %628 = vmatpush.msra.mxu0 0.0
    %629 = vmatpush.msra.mxu0 0.0
    %630 = vmatpush.msra.mxu0 0.0
    %631 = vmatpush.msra.mxu0 0.0
    %632 = vmatpush.msra.mxu0 0.0
    %633 = vmatpush.msra.mxu0 %v42
    %634 = vmatpush.msra.mxu0 %v41
    %635 = vmatpush.msra.mxu0 %v40
    %636 = vmatpush.msra.mxu0 %v39
    %637 = vmatmul.f32.gmra.mxu0 %v619
    %v638 = vpop.f32.mrf.mxu0
    %v639 = vadd.f32 %v617, %v638
    %640 = vdwg.mxu0
    %641 = vst [vmem:[%s3] sm:$0xff] %v639
    // Predicated region
    $region18: #{lstm_net_forward.1} parent=1 // pred_check
      _
    $region19: #{lstm_net_forward.1} parent=1 // pred_check_branch
      %643 = sbr.rel (0) target = $region21
    $region20: #{lstm_net_forward.1} parent=1 // pred_region
      _
    $region21: #{lstm_net_forward.1} parent=1 // pred_fallthru
      _
    // Predicated region
    $region22: #{lstm_net_forward.1} parent=1 // pred_check
      _
    $region23: #{lstm_net_forward.1} parent=1 // pred_check_branch
      %645 = sbr.rel (0) target = $region25
    $region24: #{lstm_net_forward.1} parent=1 // pred_region
      _
    $region25: #{lstm_net_forward.1} parent=1 // pred_fallthru
      _
    %646 = vsyncpa [#allocation3], 1

</llo_original>
